<compile_context>
chip_gen: v6e
topology: v6e:2x2x1
jax: 0.10.0
libtpu: 0.0.40
codegen_flags: <defaults>
</compile_context>

<pallas_src>
import jax
import jax.numpy as jnp
from jax import lax
from jax.experimental import pallas as pl
from jax.experimental.pallas import tpu as pltpu

BN_EPS = 0.001
_LANE = 128
_VMEM_BUDGET = 32 * 1024 * 1024      # conservative tile-selection budget (all gens)
_VMEM_LIMIT = 48 * 1024 * 1024       # explicit scoped-VMEM limit (< v7x 64 MiB physical)


def _round_up(n, m):
    return ((n + m - 1) // m) * m


def _pad2(a, shape):
    return jnp.pad(a, [(0, s - d) for d, s in zip(a.shape, shape)])


def _vmem_estimate(tb, n_in_p, n_hid_p, n_out_p):
    bf16, f32 = 2, 4
    # double-buffered streaming tensors: x (bf16 in), xrec + z (f32 out)
    stream = 2 * tb * (n_in_p * bf16 + n_in_p * f32 + n_out_p * f32)
    # resident weights / biases (count double buffers conservatively)
    weights = 2 * (n_hid_p * n_in_p * bf16 + n_out_p * n_hid_p * bf16
                   + n_in_p * n_out_p * bf16 + n_hid_p * f32 + n_out_p * f32)
    # intermediates h/r (f32) held in vregs/VMEM
    interm = 2 * tb * n_hid_p * f32
    return stream + weights + interm


def _pick_tb(B, n_in_p, n_hid_p, n_out_p):
    b8 = _round_up(B, 8)
    for tb in (1024, 512, 256, 128, 64, 32, 16, 8):
        if tb <= b8 and _vmem_estimate(tb, n_in_p, n_hid_p, n_out_p) <= _VMEM_BUDGET:
            return tb
    return 8


def _ae_kernel(x_ref, w1_ref, b1_ref, w2_ref, b2_ref, wd_ref, xrec_ref, z_ref):
    # x:  (TB, n_in_p) bf16
    # w1: (n_hid_p, n_in_p) bf16 (BN folded), b1: (1, n_hid_p) f32 (BN folded)
    # w2: (n_out_p, n_hid_p) bf16,            b2: (1, n_out_p) f32
    # wd: (n_in_p, n_out_p) bf16
    x = x_ref[...]

    # encoder Linear 1 + folded BatchNorm:  h = x @ W1f.T + b1f
    h = lax.dot_general(x, w1_ref[...],
                        dimension_numbers=(((1,), (1,)), ((), ())),
                        preferred_element_type=jnp.float32) + b1_ref[...]

    # ReLU (+ Dropout == identity in eval mode)
    r = jnp.maximum(h, 0.0).astype(w2_ref.dtype)

    # encoder Linear 2 -> z
    z = lax.dot_general(r, w2_ref[...],
                        dimension_numbers=(((1,), (1,)), ((), ())),
                        preferred_element_type=jnp.float32) + b2_ref[...]
    z_ref[...] = z.astype(z_ref.dtype)

    # decoder Linear (no bias) -> x reconstruction
    xrec_ref[...] = lax.dot_general(z.astype(wd_ref.dtype), wd_ref[...],
                                    dimension_numbers=(((1,), (1,)), ((), ())),
                                    preferred_element_type=jnp.float32
                                    ).astype(xrec_ref.dtype)


def autoencoder_forward(x, params):
    """Fused autoencoder forward pass as a batch-tiled Pallas kernel."""
    B, n_input = x.shape
    w1, b1, gamma, beta, run_mean, run_var, w2, b2, wd = (
        params["w1"], params["b1"], params["gamma"], params["beta"],
        params["run_mean"], params["run_var"], params["w2"], params["b2"],
        params["wd"],
    )
    n_hidden = w1.shape[0]
    n_output = w2.shape[0]

    # --- Fold BatchNorm (eval mode) into Linear 1 (f32 math, then cast). ---
    scale = gamma * lax.rsqrt(run_var + BN_EPS)              # (n_hidden,)
    w1f = w1 * scale[:, None]                                 # (n_hidden, n_input)
    b1f = (b1 - run_mean) * scale + beta                      # (n_hidden,)

    # --- Pad feature dims to lane-dense multiples of 128; pick batch tile. ---
    n_in_p = _round_up(n_input, _LANE)
    n_hid_p = _round_up(n_hidden, _LANE)
    n_out_p = _round_up(n_output, _LANE)
    tb = _pick_tb(B, n_in_p, n_hid_p, n_out_p)
    B_p = _round_up(B, tb)
    nb = B_p // tb

    x_p = _pad2(x.astype(jnp.bfloat16), (B_p, n_in_p))
    w1_p = _pad2(w1f.astype(jnp.bfloat16), (n_hid_p, n_in_p))
    b1_p = _pad2(b1f.astype(jnp.float32).reshape(1, -1), (1, n_hid_p))
    w2_p = _pad2(w2.astype(jnp.bfloat16), (n_out_p, n_hid_p))
    b2_p = _pad2(b2.astype(jnp.float32).reshape(1, -1), (1, n_out_p))
    wd_p = _pad2(wd.astype(jnp.bfloat16), (n_in_p, n_out_p))

    resident = lambda shape: pl.BlockSpec(shape, lambda i: (0, 0))
    in_specs = [
        pl.BlockSpec((tb, n_in_p), lambda i: (i, 0)),   # x: streamed per batch tile
        resident((n_hid_p, n_in_p)),                    # w1 (BN-folded)
        resident((1, n_hid_p)),                         # b1 (BN-folded)
        resident((n_out_p, n_hid_p)),                   # w2
        resident((1, n_out_p)),                         # b2
        resident((n_in_p, n_out_p)),                    # wd
    ]
    out_specs = (
        pl.BlockSpec((tb, n_in_p), lambda i: (i, 0)),   # x reconstruction
        pl.BlockSpec((tb, n_out_p), lambda i: (i, 0)),  # z
    )

    xrec_p, z_p = pl.pallas_call(
        _ae_kernel,
        out_shape=(
            jax.ShapeDtypeStruct((B_p, n_in_p), jnp.float32),
            jax.ShapeDtypeStruct((B_p, n_out_p), jnp.float32),
        ),
        grid=(nb,),
        in_specs=in_specs,
        out_specs=out_specs,
        compiler_params=pltpu.CompilerParams(
            dimension_semantics=("parallel",),
            vmem_limit_bytes=_VMEM_LIMIT,
        ),
    )(x_p, w1_p, b1_p, w2_p, b2_p, wd_p)

    # Strip batch / feature padding.
    return xrec_p[:B, :n_input], z_p[:B, :n_output]


def init_params(key, n_input, n_hidden, n_output):
    """Deterministic synthetic parameter init (PyTorch-layout shapes)."""
    k1, k2, k3, k4, k5 = jax.random.split(key, 5)
    s1 = 1.0 / jnp.sqrt(n_input)
    s2 = 1.0 / jnp.sqrt(n_hidden)
    s3 = 1.0 / jnp.sqrt(n_output)
    return {
        "w1": jax.random.uniform(k1, (n_hidden, n_input), jnp.float32, -s1, s1),
        "b1": jax.random.uniform(k2, (n_hidden,), jnp.float32, -s1, s1),
        "gamma": jnp.ones((n_hidden,), jnp.float32),
        "beta": jnp.zeros((n_hidden,), jnp.float32),
        "run_mean": jnp.zeros((n_hidden,), jnp.float32),
        "run_var": jnp.ones((n_hidden,), jnp.float32),
        "w2": jax.random.uniform(k3, (n_output, n_hidden), jnp.float32, -s2, s2),
        "b2": jax.random.uniform(k4, (n_output,), jnp.float32, -s2, s2),
        "wd": jax.random.uniform(k5, (n_input, n_output), jnp.float32, -s3, s3),
    }


def _reference(x, p):
    h = x @ p["w1"].T + p["b1"]
    bn = p["gamma"] * (h - p["run_mean"]) / jnp.sqrt(p["run_var"] + BN_EPS) + p["beta"]
    r = jnp.maximum(bn, 0.0)
    z = r @ p["w2"].T + p["b2"]
    return z @ p["wd"].T, z


if __name__ == "__main__":
    B, n_input, n_hidden, n_output = 8, 32, 64, 16

    key = jax.random.PRNGKey(0)
    kx, kp = jax.random.split(key)
    x = jax.random.normal(kx, (B, n_input), dtype=jnp.float32)
    params = init_params(kp, n_input, n_hidden, n_output)

    xrec, z = autoencoder_forward(x, params)
    jax.block_until_ready((xrec, z))

    xrec_ref, z_ref = _reference(x, params)
    # bf16 inputs/weights with f32 accumulation -> looser tolerance than pure f32.
    assert jnp.allclose(xrec, xrec_ref, atol=5e-2, rtol=5e-2), "xrec mismatch"
    assert jnp.allclose(z, z_ref, atol=5e-2, rtol=5e-2), "z mismatch"

    print("KERNEL_OK")
</pallas_src>

<mosaic_0001>
module attributes {stable_mosaic.version = 11 : i64} {
  func.func @_ae_kernel(%arg0: i32, %arg1: memref<8x128xbf16, #tpu.memory_space<vmem>>, %arg2: memref<128x128xbf16, #tpu.memory_space<vmem>>, %arg3: memref<1x128xf32, #tpu.memory_space<vmem>>, %arg4: memref<128x128xbf16, #tpu.memory_space<vmem>>, %arg5: memref<1x128xf32, #tpu.memory_space<vmem>>, %arg6: memref<128x128xbf16, #tpu.memory_space<vmem>>, %arg7: memref<8x128xf32, #tpu.memory_space<vmem>>, %arg8: memref<8x128xf32, #tpu.memory_space<vmem>>) attributes {dimension_semantics = [#tpu.dimension_semantics<parallel>], iteration_bounds = array<i64: 1>, scalar_prefetch = 0 : i64, scratch_operands = 0 : i64, tpu.core_type = #tpu.core_type<tc>, window_params = [{transform_indices = @transform_0, window_bounds = array<i64: 8, 128>}, {pipeline_mode = #tpu.pipeline_mode<synchronous>, transform_indices = @transform_1, window_bounds = array<i64: 128, 128>}, {pipeline_mode = #tpu.pipeline_mode<synchronous>, transform_indices = @transform_2, window_bounds = array<i64: 1, 128>}, {pipeline_mode = #tpu.pipeline_mode<synchronous>, transform_indices = @transform_3, window_bounds = array<i64: 128, 128>}, {pipeline_mode = #tpu.pipeline_mode<synchronous>, transform_indices = @transform_4, window_bounds = array<i64: 1, 128>}, {pipeline_mode = #tpu.pipeline_mode<synchronous>, transform_indices = @transform_5, window_bounds = array<i64: 128, 128>}, {transform_indices = @transform_6, window_bounds = array<i64: 8, 128>}, {transform_indices = @transform_7, window_bounds = array<i64: 8, 128>}]} {
    %c0 = arith.constant 0 : index
    %c0_0 = arith.constant 0 : index
    %0 = vector.load %arg1[%c0, %c0_0] : memref<8x128xbf16, #tpu.memory_space<vmem>>, vector<8x128xbf16>
    %c0_1 = arith.constant 0 : index
    %c0_2 = arith.constant 0 : index
    %1 = vector.load %arg2[%c0_1, %c0_2] : memref<128x128xbf16, #tpu.memory_space<vmem>>, vector<128x128xbf16>
    %cst = arith.constant dense<0.000000e+00> : vector<8x128xf32>
    %2 = tpu.matmul %0, %1, %cst {dimension_numbers = #tpu.dot_dimension_numbers<[1], [1], [0], [0], [0, 0, 1, 0], [], []>} : vector<8x128xbf16>, vector<128x128xbf16>, vector<8x128xf32> -> vector<8x128xf32>
    %c0_3 = arith.constant 0 : index
    %c0_4 = arith.constant 0 : index
    %3 = vector.load %arg3[%c0_3, %c0_4] : memref<1x128xf32, #tpu.memory_space<vmem>>, vector<1x128xf32>
    %4 = vector.broadcast %3 : vector<1x128xf32> to vector<8x128xf32>
    %5 = arith.addf %2, %4 : vector<8x128xf32>
    %cst_5 = arith.constant 0.000000e+00 : f32
    %6 = vector.broadcast %cst_5 : f32 to vector<8x128xf32>
    %7 = arith.maximumf %5, %6 : vector<8x128xf32>
    %8 = arith.truncf %7 : vector<8x128xf32> to vector<8x128xbf16>
    %c0_6 = arith.constant 0 : index
    %c0_7 = arith.constant 0 : index
    %9 = vector.load %arg4[%c0_6, %c0_7] : memref<128x128xbf16, #tpu.memory_space<vmem>>, vector<128x128xbf16>
    %cst_8 = arith.constant dense<0.000000e+00> : vector<8x128xf32>
    %10 = tpu.matmul %8, %9, %cst_8 {dimension_numbers = #tpu.dot_dimension_numbers<[1], [1], [0], [0], [0, 0, 1, 0], [], []>} : vector<8x128xbf16>, vector<128x128xbf16>, vector<8x128xf32> -> vector<8x128xf32>
    %c0_9 = arith.constant 0 : index
    %c0_10 = arith.constant 0 : index
    %11 = vector.load %arg5[%c0_9, %c0_10] : memref<1x128xf32, #tpu.memory_space<vmem>>, vector<1x128xf32>
    %12 = vector.broadcast %11 : vector<1x128xf32> to vector<8x128xf32>
    %13 = arith.addf %10, %12 : vector<8x128xf32>
    %c0_11 = arith.constant 0 : index
    %c0_12 = arith.constant 0 : index
    %14 = vector.load %arg8[%c0_11, %c0_12] : memref<8x128xf32, #tpu.memory_space<vmem>>, vector<8x128xf32>
    tpu.vector_store %arg8[%c0_11, %c0_12], %13 {strides = array<i32>} : memref<8x128xf32, #tpu.memory_space<vmem>>, vector<8x128xf32>,
    %15 = arith.truncf %13 : vector<8x128xf32> to vector<8x128xbf16>
    %c0_13 = arith.constant 0 : index
    %c0_14 = arith.constant 0 : index
    %16 = vector.load %arg6[%c0_13, %c0_14] : memref<128x128xbf16, #tpu.memory_space<vmem>>, vector<128x128xbf16>
    %cst_15 = arith.constant dense<0.000000e+00> : vector<8x128xf32>
    %17 = tpu.matmul %15, %16, %cst_15 {dimension_numbers = #tpu.dot_dimension_numbers<[1], [1], [0], [0], [0, 0, 1, 0], [], []>} : vector<8x128xbf16>, vector<128x128xbf16>, vector<8x128xf32> -> vector<8x128xf32>
    %c0_16 = arith.constant 0 : index
    %c0_17 = arith.constant 0 : index
    %18 = vector.load %arg7[%c0_16, %c0_17] : memref<8x128xf32, #tpu.memory_space<vmem>>, vector<8x128xf32>
    tpu.vector_store %arg7[%c0_16, %c0_17], %17 {strides = array<i32>} : memref<8x128xf32, #tpu.memory_space<vmem>>, vector<8x128xf32>,
    return
  }
  func.func @transform_0(%arg0: i32) -> (i32, i32) {
    %c0_i32 = arith.constant 0 : i32
    %c0_i32_0 = arith.constant 0 : i32
    return %arg0, %c0_i32 : i32, i32
  }
  func.func @transform_1(%arg0: i32) -> (i32, i32) {
    %c0_i32 = arith.constant 0 : i32
    %c0_i32_0 = arith.constant 0 : i32
    %c0_i32_1 = arith.constant 0 : i32
    return %c0_i32, %c0_i32_0 : i32, i32
  }
  func.func @transform_2(%arg0: i32) -> (i32, i32) {
    %c0_i32 = arith.constant 0 : i32
    %c0_i32_0 = arith.constant 0 : i32
    %c0_i32_1 = arith.constant 0 : i32
    return %c0_i32, %c0_i32_0 : i32, i32
  }
  func.func @transform_3(%arg0: i32) -> (i32, i32) {
    %c0_i32 = arith.constant 0 : i32
    %c0_i32_0 = arith.constant 0 : i32
    %c0_i32_1 = arith.constant 0 : i32
    return %c0_i32, %c0_i32_0 : i32, i32
  }
  func.func @transform_4(%arg0: i32) -> (i32, i32) {
    %c0_i32 = arith.constant 0 : i32
    %c0_i32_0 = arith.constant 0 : i32
    %c0_i32_1 = arith.constant 0 : i32
    return %c0_i32, %c0_i32_0 : i32, i32
  }
  func.func @transform_5(%arg0: i32) -> (i32, i32) {
    %c0_i32 = arith.constant 0 : i32
    %c0_i32_0 = arith.constant 0 : i32
    %c0_i32_1 = arith.constant 0 : i32
    return %c0_i32, %c0_i32_0 : i32, i32
  }
  func.func @transform_6(%arg0: i32) -> (i32, i32) {
    %c0_i32 = arith.constant 0 : i32
    %c0_i32_0 = arith.constant 0 : i32
    return %arg0, %c0_i32 : i32, i32
  }
  func.func @transform_7(%arg0: i32) -> (i32, i32) {
    %c0_i32 = arith.constant 0 : i32
    %c0_i32_0 = arith.constant 0 : i32
    return %arg0, %c0_i32 : i32, i32
  }
}

</mosaic_0001>

<llo_original>
// kernel: tpu_custom_call.1
$region0: #{tpu_custom_call.1}
  #allocation0 [shape = 'u32[]', space=smem, size = 0x4, offset = 0x4, fixed_abs, tag = 'smem constant byte address 0x4 - core index']
  #allocation1 [shape = 'u32[144,128]{1,0:T(1,128)}', space=vmem, size = 0x12000, scoped, tag = 'internal scratch']
  %s0 = inlined_call_operand.hbm [shape: bf16[8,128], index: 0, kind: input, shape index: {}]
  %s1 = inlined_call_operand.hbm [shape: bf16[128,128], index: 1, kind: input, shape index: {}]
  %s2 = inlined_call_operand.vmem [shape: f32[1,128], index: 2, kind: input, shape index: {}]
  %s3 = inlined_call_operand.hbm [shape: bf16[128,128], index: 3, kind: input, shape index: {}]
  %s4 = inlined_call_operand.vmem [shape: f32[1,128], index: 4, kind: input, shape index: {}]
  %s5 = inlined_call_operand.hbm [shape: bf16[128,128], index: 5, kind: input, shape index: {}]
  %s6 = inlined_call_operand.hbm [shape: f32[8,128], index: 6, kind: output, shape index: {0}]
  %s7 = inlined_call_operand.hbm [shape: f32[8,128], index: 7, kind: output, shape index: {1}]
  %8 = xla_tuple %s6, %s7
  %s9 = sld [smem:[#allocation0]]
  $region58: #{tpu_custom_call.1} parent=0
    _
  %s11 = ssub.s32 1, %s9
  %s12 = scalar_select 0, %s11, %s9
  $region1: #{tpu_custom_call.1} parent=0
    #allocation2 [shape = 'u8[2048]{0}', space=vmem, size = 0x800, scoped, tag = 'input window, operand 0, single buffered']
    #allocation3 [shape = 's32[1]{0}', space=sflag, size = 0x4, scoped, tag = 'scoped memory for tpu_custom_call.1']
    #allocation4 [shape = 's32[1]{0}', space=sflag, size = 0x4, scoped, tag = 'scoped memory for tpu_custom_call.1']
    #allocation5 [shape = 'u8[32768]{0}', space=vmem, size = 0x8000, scoped, tag = 'input window, operand 1, single buffered']
    #allocation6 [shape = 's32[1]{0}', space=sflag, size = 0x4, scoped, tag = 'scoped memory for tpu_custom_call.1']
    #allocation7 [shape = 'u8[32768]{0}', space=vmem, size = 0x8000, scoped, tag = 'input window, operand 3, single buffered']
    #allocation8 [shape = 'u8[32768]{0}', space=vmem, size = 0x8000, scoped, tag = 'input window, operand 5, single buffered']
    #allocation9 [shape = 's32[1]{0}', space=sflag, size = 0x4, scoped, tag = 'scoped memory for tpu_custom_call.1']
    #allocation10 [shape = 'u8[4096]{0}', space=vmem, size = 0x1000, scoped, tag = 'output window, operand 0, single buffered']
    #allocation11 [shape = 'u8[4096]{0}', space=vmem, size = 0x1000, scoped, tag = 'output window, operand 1, single buffered']
    #allocation12 [shape = 's32[1]{0}', space=sflag, size = 0x4, scoped, tag = 'scoped memory for tpu_custom_call.1']
    %13 = vsyncpa [#allocation3], 0
    %14 = vsyncpa [#allocation6], 0
    %15 = vsyncpa [#allocation9], 0
    %16 = vsyncpa [#allocation4], 0
    %17 = vsyncpa [#allocation12], 0
    // Predicated region
    $region2: #{tpu_custom_call.1} parent=1 // pred_check
      _
    $region3: #{tpu_custom_call.1} parent=1 // pred_check_branch
      %19 = sbr.rel (0) target = $region5
    $region4: #{tpu_custom_call.1} parent=1 // pred_region
      %s21 = ssub.s32 64, 64
      %22 = vsyncadd [#allocation3], %s21
      %s24 = sshll.u32 [#allocation2], 4
      %s25 = int_to_ptr.vmem [resolvable:$true] %s24
      %27 = dma.hbm_to_vmem [thread:$0]  %s0, 64, %s25, [#allocation3]
    $region5: #{tpu_custom_call.1} parent=1 // pred_fallthru
      _
    // Predicated region
    $region6: #{tpu_custom_call.1} parent=1 // pred_check
      _
    $region7: #{tpu_custom_call.1} parent=1 // pred_check_branch
      %29 = sbr.rel (0) target = $region9
    $region8: #{tpu_custom_call.1} parent=1 // pred_region
      %s31 = ssub.s32 1024, 1024
      %32 = vsyncadd [#allocation6], %s31
      %s33 = sshll.u32 [#allocation5], 4
      %s34 = int_to_ptr.vmem [resolvable:$true] %s33
      %39 = dma.hbm_to_vmem [thread:$0]  %s1, 1024, %s34, [#allocation6], 64, 64, 4
    $region9: #{tpu_custom_call.1} parent=1 // pred_fallthru
      _
    // Predicated region
    $region10: #{tpu_custom_call.1} parent=1 // pred_check
      _
    $region11: #{tpu_custom_call.1} parent=1 // pred_check_branch
      %41 = sbr.rel (0) target = $region13
    $region12: #{tpu_custom_call.1} parent=1 // pred_region
      _
    $region13: #{tpu_custom_call.1} parent=1 // pred_fallthru
      _
    // Predicated region
    $region14: #{tpu_custom_call.1} parent=1 // pred_check
      _
    $region15: #{tpu_custom_call.1} parent=1 // pred_check_branch
      %43 = sbr.rel (0) target = $region17
    $region16: #{tpu_custom_call.1} parent=1 // pred_region
      %s45 = ssub.s32 1024, 1024
      %46 = vsyncadd [#allocation6], %s45
      %s47 = sshll.u32 [#allocation7], 4
      %s48 = int_to_ptr.vmem [resolvable:$true] %s47
      %53 = dma.hbm_to_vmem [thread:$0]  %s3, 1024, %s48, [#allocation6], 64, 64, 4
    $region17: #{tpu_custom_call.1} parent=1 // pred_fallthru
      _
    // Predicated region
    $region18: #{tpu_custom_call.1} parent=1 // pred_check
      _
    $region19: #{tpu_custom_call.1} parent=1 // pred_check_branch
      %55 = sbr.rel (0) target = $region21
    $region20: #{tpu_custom_call.1} parent=1 // pred_region
      _
    $region21: #{tpu_custom_call.1} parent=1 // pred_fallthru
      _
    // Predicated region
    $region22: #{tpu_custom_call.1} parent=1 // pred_check
      _
    $region23: #{tpu_custom_call.1} parent=1 // pred_check_branch
      %57 = sbr.rel (0) target = $region25
    $region24: #{tpu_custom_call.1} parent=1 // pred_region
      %s59 = ssub.s32 1024, 1024
      %60 = vsyncadd [#allocation9], %s59
      %s61 = sshll.u32 [#allocation8], 4
      %s62 = int_to_ptr.vmem [resolvable:$true] %s61
      %67 = dma.hbm_to_vmem [thread:$0]  %s5, 1024, %s62, [#allocation9], 64, 64, 4
    $region25: #{tpu_custom_call.1} parent=1 // pred_fallthru
      _
    // Predicated region
    $region26: #{tpu_custom_call.1} parent=1 // pred_check
      _
    $region27: #{tpu_custom_call.1} parent=1 // pred_check_branch
      %69 = sbr.rel (0) target = $region29
    $region28: #{tpu_custom_call.1} parent=1 // pred_region
      %70 = dma.done [#allocation3], 64
    $region29: #{tpu_custom_call.1} parent=1 // pred_fallthru
      _
    // Predicated region
    $region30: #{tpu_custom_call.1} parent=1 // pred_check
      _
    $region31: #{tpu_custom_call.1} parent=1 // pred_check_branch
      %72 = sbr.rel (0) target = $region33
    $region32: #{tpu_custom_call.1} parent=1 // pred_region
      %73 = dma.done [#allocation6], 1024
    $region33: #{tpu_custom_call.1} parent=1 // pred_fallthru
      _
    // Predicated region
    $region34: #{tpu_custom_call.1} parent=1 // pred_check
      _
    $region35: #{tpu_custom_call.1} parent=1 // pred_check_branch
      %75 = sbr.rel (0) target = $region37
    $region36: #{tpu_custom_call.1} parent=1 // pred_region
      %76 = dma.done [#allocation6], 1024
    $region37: #{tpu_custom_call.1} parent=1 // pred_fallthru
      _
    // Predicated region
    $region38: #{tpu_custom_call.1} parent=1 // pred_check
      _
    $region39: #{tpu_custom_call.1} parent=1 // pred_check_branch
      %78 = sbr.rel (0) target = $region41
    $region40: #{tpu_custom_call.1} parent=1 // pred_region
      %79 = dma.done [#allocation9], 1024
    $region41: #{tpu_custom_call.1} parent=1 // pred_fallthru
      _
    %v81 = vld [vmem:[#allocation2] sm:$0xf]
    %v82 = vld [vmem:[#allocation5] sm:$0xf]
    %v83 = vld [vmem:[#allocation5 + $0x4] sm:$0xf]
    %v84 = vld [vmem:[#allocation5 + $0x8] sm:$0xf]
    %v85 = vld [vmem:[#allocation5 + $0xc] sm:$0xf]
    %v86 = vld [vmem:[#allocation5 + $0x10] sm:$0xf]
    %v87 = vld [vmem:[#allocation5 + $0x14] sm:$0xf]
    %v88 = vld [vmem:[#allocation5 + $0x18] sm:$0xf]
    %v89 = vld [vmem:[#allocation5 + $0x1c] sm:$0xf]
    %v90 = vld [vmem:[#allocation5 + $0x20] sm:$0xf]
    %v91 = vld [vmem:[#allocation5 + $0x24] sm:$0xf]
    %v92 = vld [vmem:[#allocation5 + $0x28] sm:$0xf]
    %v93 = vld [vmem:[#allocation5 + $0x2c] sm:$0xf]
    %v94 = vld [vmem:[#allocation5 + $0x30] sm:$0xf]
    %v95 = vld [vmem:[#allocation5 + $0x34] sm:$0xf]
    %v96 = vld [vmem:[#allocation5 + $0x38] sm:$0xf]
    %v97 = vld [vmem:[#allocation5 + $0x3c] sm:$0xf]
    %v98 = vld [vmem:[%s2] sm:$0x1]
    %v100 = vlaneseq
    %v101 = vshrl.u32 %v100, 7
    %v102 = vsub.s32 0, %v101
    %v103 = vrot.slane %v98, %v102
    %v121 = vunpack.c.l.b16 %v82
    %v122 = vunpack.c.l.b16 %v83
    %v123 = vunpack.c.l.b16 %v84
    %v124 = vunpack.c.l.b16 %v85
    %v125 = vunpack.c.l.b16 %v86
    %v126 = vunpack.c.l.b16 %v87
    %v127 = vunpack.c.l.b16 %v88
    %v128 = vunpack.c.l.b16 %v89
    %v129 = vunpack.c.l.b16 %v90
    %v130 = vunpack.c.l.b16 %v91
    %v131 = vunpack.c.l.b16 %v92
    %v132 = vunpack.c.l.b16 %v93
    %v133 = vunpack.c.l.b16 %v94
    %v134 = vunpack.c.l.b16 %v95
    %v135 = vunpack.c.l.b16 %v96
    %v136 = vunpack.c.l.b16 %v97
    %v137 = vpack.c.b16 %v122, %v121
    %v138 = vpack.c.b16 %v124, %v123
    %v139 = vpack.c.b16 %v126, %v125
    %v140 = vpack.c.b16 %v128, %v127
    %v141 = vpack.c.b16 %v130, %v129
    %v142 = vpack.c.b16 %v132, %v131
    %v143 = vpack.c.b16 %v134, %v133
    %v144 = vpack.c.b16 %v136, %v135
    %153 = vmatprep.subr.bf16.mxu0 0
    %154 = vmatpush1.bf16.xpose.msra.mxu0 %v144
    %155 = vmatprep.subr.bf16.mxu0 0
    %156 = vmatpush1.bf16.xpose.msra.mxu0 %v143
    %157 = vmatprep.subr.bf16.mxu0 0
    %158 = vmatpush1.bf16.xpose.msra.mxu0 %v142
    %159 = vmatprep.subr.bf16.mxu0 0
    %160 = vmatpush1.bf16.xpose.msra.mxu0 %v141
    %161 = vmatprep.subr.bf16.mxu0 0
    %162 = vmatpush1.bf16.xpose.msra.mxu0 %v140
    %163 = vmatprep.subr.bf16.mxu0 0
    %164 = vmatpush1.bf16.xpose.msra.mxu0 %v139
    %165 = vmatprep.subr.bf16.mxu0 0
    %166 = vmatpush1.bf16.xpose.msra.mxu0 %v138
    %167 = vmatprep.subr.bf16.mxu0 0
    %168 = vmatpush1.bf16.xpose.msra.mxu0 %v137
    %169 = vmatprep.subr.bf16.mxu0 0
    %170 = vmatpush2.bf16.xpose.msra.mxu0 0
    %171 = vmatprep.subr.bf16.mxu0 0
    %172 = vmatpush2.bf16.xpose.msra.mxu0 0
    %173 = vmatprep.subr.bf16.mxu0 0
    %174 = vmatpush2.bf16.xpose.msra.mxu0 0
    %175 = vmatprep.subr.bf16.mxu0 0
    %176 = vmatpush2.bf16.xpose.msra.mxu0 0
    %177 = vmatprep.subr.bf16.mxu0 0
    %178 = vmatpush2.bf16.xpose.msra.mxu0 0
    %179 = vmatprep.subr.bf16.mxu0 0
    %180 = vmatpush2.bf16.xpose.msra.mxu0 0
    %181 = vmatprep.subr.bf16.mxu0 0
    %182 = vmatpush2.bf16.xpose.msra.mxu0 0
    %183 = vmatprep.subr.bf16.mxu0 0
    %184 = vmatpush2.bf16.xpose.msra.mxu0 0
    %185 = vmatprep.mubr.bf16.mxu0 0
    %186 = vmatmul.mubr.bf16.gmra.mxu0 %v81
    %v187 = vpop.f32.mrf.mxu0
    %v188 = vadd.f32 %v103, %v187
    %v189 = vpop.f32.mrf.mxu0
    %v190 = vpop.f32.mrf.mxu0
    %v191 = vpop.f32.mrf.mxu0
    %192 = vdwg.mxu0
    %v193 = vmax.f32 %v188, 0.0
    %v194 = vpack.c.bf16 %v193, %v193
    %v195 = vld [vmem:[#allocation7] sm:$0xf]
    %v196 = vld [vmem:[#allocation7 + $0x4] sm:$0xf]
    %v197 = vld [vmem:[#allocation7 + $0x8] sm:$0xf]
    %v198 = vld [vmem:[#allocation7 + $0xc] sm:$0xf]
    %v199 = vld [vmem:[#allocation7 + $0x10] sm:$0xf]
    %v200 = vld [vmem:[#allocation7 + $0x14] sm:$0xf]
    %v201 = vld [vmem:[#allocation7 + $0x18] sm:$0xf]
    %v202 = vld [vmem:[#allocation7 + $0x1c] sm:$0xf]
    %v203 = vld [vmem:[#allocation7 + $0x20] sm:$0xf]
    %v204 = vld [vmem:[#allocation7 + $0x24] sm:$0xf]
    %v205 = vld [vmem:[#allocation7 + $0x28] sm:$0xf]
    %v206 = vld [vmem:[#allocation7 + $0x2c] sm:$0xf]
    %v207 = vld [vmem:[#allocation7 + $0x30] sm:$0xf]
    %v208 = vld [vmem:[#allocation7 + $0x34] sm:$0xf]
    %v209 = vld [vmem:[#allocation7 + $0x38] sm:$0xf]
    %v210 = vld [vmem:[#allocation7 + $0x3c] sm:$0xf]
    %v211 = vld [vmem:[%s4] sm:$0x1]
    %v213 = vlaneseq
    %v214 = vshrl.u32 %v213, 7
    %v215 = vsub.s32 0, %v214
    %v216 = vrot.slane %v211, %v215
    %v234 = vunpack.c.l.b16 %v195
    %v235 = vunpack.c.l.b16 %v196
    %v236 = vunpack.c.l.b16 %v197
    %v237 = vunpack.c.l.b16 %v198
    %v238 = vunpack.c.l.b16 %v199
    %v239 = vunpack.c.l.b16 %v200
    %v240 = vunpack.c.l.b16 %v201
    %v241 = vunpack.c.l.b16 %v202
    %v242 = vunpack.c.l.b16 %v203
    %v243 = vunpack.c.l.b16 %v204
    %v244 = vunpack.c.l.b16 %v205
    %v245 = vunpack.c.l.b16 %v206
    %v246 = vunpack.c.l.b16 %v207
    %v247 = vunpack.c.l.b16 %v208
    %v248 = vunpack.c.l.b16 %v209
    %v249 = vunpack.c.l.b16 %v210
    %v250 = vpack.c.b16 %v235, %v234
    %v251 = vpack.c.b16 %v237, %v236
    %v252 = vpack.c.b16 %v239, %v238
    %v253 = vpack.c.b16 %v241, %v240
    %v254 = vpack.c.b16 %v243, %v242
    %v255 = vpack.c.b16 %v245, %v244
    %v256 = vpack.c.b16 %v247, %v246
    %v257 = vpack.c.b16 %v249, %v248
    %266 = vmatprep.subr.bf16.mxu0 0
    %267 = vmatpush1.bf16.xpose.msra.mxu0 %v257
    %268 = vmatprep.subr.bf16.mxu0 0
    %269 = vmatpush1.bf16.xpose.msra.mxu0 %v256
    %270 = vmatprep.subr.bf16.mxu0 0
    %271 = vmatpush1.bf16.xpose.msra.mxu0 %v255
    %272 = vmatprep.subr.bf16.mxu0 0
    %273 = vmatpush1.bf16.xpose.msra.mxu0 %v254
    %274 = vmatprep.subr.bf16.mxu0 0
    %275 = vmatpush1.bf16.xpose.msra.mxu0 %v253
    %276 = vmatprep.subr.bf16.mxu0 0
    %277 = vmatpush1.bf16.xpose.msra.mxu0 %v252
    %278 = vmatprep.subr.bf16.mxu0 0
    %279 = vmatpush1.bf16.xpose.msra.mxu0 %v251
    %280 = vmatprep.subr.bf16.mxu0 0
    %281 = vmatpush1.bf16.xpose.msra.mxu0 %v250
    %282 = vmatprep.subr.bf16.mxu0 0
    %283 = vmatpush2.bf16.xpose.msra.mxu0 0
    %284 = vmatprep.subr.bf16.mxu0 0
    %285 = vmatpush2.bf16.xpose.msra.mxu0 0
    %286 = vmatprep.subr.bf16.mxu0 0
    %287 = vmatpush2.bf16.xpose.msra.mxu0 0
    %288 = vmatprep.subr.bf16.mxu0 0
    %289 = vmatpush2.bf16.xpose.msra.mxu0 0
    %290 = vmatprep.subr.bf16.mxu0 0
    %291 = vmatpush2.bf16.xpose.msra.mxu0 0
    %292 = vmatprep.subr.bf16.mxu0 0
    %293 = vmatpush2.bf16.xpose.msra.mxu0 0
    %294 = vmatprep.subr.bf16.mxu0 0
    %295 = vmatpush2.bf16.xpose.msra.mxu0 0
    %296 = vmatprep.subr.bf16.mxu0 0
    %297 = vmatpush2.bf16.xpose.msra.mxu0 0
    %298 = vmatprep.mubr.bf16.mxu0 0
    %299 = vmatmul.mubr.bf16.gmra.mxu0 %v194
    %v300 = vpop.f32.mrf.mxu0
    %v301 = vadd.f32 %v216, %v300
    %v302 = vpop.f32.mrf.mxu0
    %v303 = vpop.f32.mrf.mxu0
    %v304 = vpop.f32.mrf.mxu0
    %305 = vdwg.mxu0
    %306 = vst [vmem:[#allocation11] sm:$0xff] %v301
    %v307 = vpack.c.bf16 %v301, %v301
    %v308 = vld [vmem:[#allocation8] sm:$0xf]
    %v309 = vld [vmem:[#allocation8 + $0x4] sm:$0xf]
    %v310 = vld [vmem:[#allocation8 + $0x8] sm:$0xf]
    %v311 = vld [vmem:[#allocation8 + $0xc] sm:$0xf]
    %v312 = vld [vmem:[#allocation8 + $0x10] sm:$0xf]
    %v313 = vld [vmem:[#allocation8 + $0x14] sm:$0xf]
    %v314 = vld [vmem:[#allocation8 + $0x18] sm:$0xf]
    %v315 = vld [vmem:[#allocation8 + $0x1c] sm:$0xf]
    %v316 = vld [vmem:[#allocation8 + $0x20] sm:$0xf]
    %v317 = vld [vmem:[#allocation8 + $0x24] sm:$0xf]
    %v318 = vld [vmem:[#allocation8 + $0x28] sm:$0xf]
    %v319 = vld [vmem:[#allocation8 + $0x2c] sm:$0xf]
    %v320 = vld [vmem:[#allocation8 + $0x30] sm:$0xf]
    %v321 = vld [vmem:[#allocation8 + $0x34] sm:$0xf]
    %v322 = vld [vmem:[#allocation8 + $0x38] sm:$0xf]
    %v323 = vld [vmem:[#allocation8 + $0x3c] sm:$0xf]
    %v340 = vunpack.c.l.b16 %v308
    %v341 = vunpack.c.l.b16 %v309
    %v342 = vunpack.c.l.b16 %v310
    %v343 = vunpack.c.l.b16 %v311
    %v344 = vunpack.c.l.b16 %v312
    %v345 = vunpack.c.l.b16 %v313
    %v346 = vunpack.c.l.b16 %v314
    %v347 = vunpack.c.l.b16 %v315
    %v348 = vunpack.c.l.b16 %v316
    %v349 = vunpack.c.l.b16 %v317
    %v350 = vunpack.c.l.b16 %v318
    %v351 = vunpack.c.l.b16 %v319
    %v352 = vunpack.c.l.b16 %v320
    %v353 = vunpack.c.l.b16 %v321
    %v354 = vunpack.c.l.b16 %v322
    %v355 = vunpack.c.l.b16 %v323
    %v356 = vpack.c.b16 %v341, %v340
    %v357 = vpack.c.b16 %v343, %v342
    %v358 = vpack.c.b16 %v345, %v344
    %v359 = vpack.c.b16 %v347, %v346
    %v360 = vpack.c.b16 %v349, %v348
    %v361 = vpack.c.b16 %v351, %v350
    %v362 = vpack.c.b16 %v353, %v352
    %v363 = vpack.c.b16 %v355, %v354
    %372 = vmatprep.subr.bf16.mxu0 0
    %373 = vmatpush1.bf16.xpose.msra.mxu0 %v363
    %374 = vmatprep.subr.bf16.mxu0 0
    %375 = vmatpush1.bf16.xpose.msra.mxu0 %v362
    %376 = vmatprep.subr.bf16.mxu0 0
    %377 = vmatpush1.bf16.xpose.msra.mxu0 %v361
    %378 = vmatprep.subr.bf16.mxu0 0
    %379 = vmatpush1.bf16.xpose.msra.mxu0 %v360
    %380 = vmatprep.subr.bf16.mxu0 0
    %381 = vmatpush1.bf16.xpose.msra.mxu0 %v359
    %382 = vmatprep.subr.bf16.mxu0 0
    %383 = vmatpush1.bf16.xpose.msra.mxu0 %v358
    %384 = vmatprep.subr.bf16.mxu0 0
    %385 = vmatpush1.bf16.xpose.msra.mxu0 %v357
    %386 = vmatprep.subr.bf16.mxu0 0
    %387 = vmatpush1.bf16.xpose.msra.mxu0 %v356
    %388 = vmatprep.subr.bf16.mxu0 0
    %389 = vmatpush2.bf16.xpose.msra.mxu0 0
    %390 = vmatprep.subr.bf16.mxu0 0
    %391 = vmatpush2.bf16.xpose.msra.mxu0 0
    %392 = vmatprep.subr.bf16.mxu0 0
    %393 = vmatpush2.bf16.xpose.msra.mxu0 0
    %394 = vmatprep.subr.bf16.mxu0 0
    %395 = vmatpush2.bf16.xpose.msra.mxu0 0
    %396 = vmatprep.subr.bf16.mxu0 0
    %397 = vmatpush2.bf16.xpose.msra.mxu0 0
    %398 = vmatprep.subr.bf16.mxu0 0
    %399 = vmatpush2.bf16.xpose.msra.mxu0 0
    %400 = vmatprep.subr.bf16.mxu0 0
    %401 = vmatpush2.bf16.xpose.msra.mxu0 0
    %402 = vmatprep.subr.bf16.mxu0 0
    %403 = vmatpush2.bf16.xpose.msra.mxu0 0
    %404 = vmatprep.mubr.bf16.mxu0 0
    %405 = vmatmul.mubr.bf16.gmra.mxu0 %v307
    %v406 = vpop.f32.mrf.mxu0
    %v407 = vadd.f32 0.0, %v406
    %v408 = vpop.f32.mrf.mxu0
    %v409 = vpop.f32.mrf.mxu0
    %v410 = vpop.f32.mrf.mxu0
    %411 = vdwg.mxu0
    %412 = vst [vmem:[#allocation10] sm:$0xff] %v407
    // Predicated region
    $region42: #{tpu_custom_call.1} parent=1 // pred_check
      _
    $region43: #{tpu_custom_call.1} parent=1 // pred_check_branch
      %414 = sbr.rel (0) target = $region45
    $region44: #{tpu_custom_call.1} parent=1 // pred_region
      %s416 = ssub.s32 128, 128
      %417 = vsyncadd [#allocation4], %s416
      %s419 = sshll.u32 [#allocation10], 4
      %s420 = int_to_ptr.vmem [resolvable:$true] %s419
      %422 = dma.vmem_to_hbm [thread:$0]  %s420, 128, %s6, [#allocation4]
    $region45: #{tpu_custom_call.1} parent=1 // pred_fallthru
      _
    // Predicated region
    $region46: #{tpu_custom_call.1} parent=1 // pred_check
      _
    $region47: #{tpu_custom_call.1} parent=1 // pred_check_branch
      %424 = sbr.rel (0) target = $region49
    $region48: #{tpu_custom_call.1} parent=1 // pred_region
      %s426 = ssub.s32 128, 128
      %427 = vsyncadd [#allocation12], %s426
      %s429 = sshll.u32 [#allocation11], 4
      %s430 = int_to_ptr.vmem [resolvable:$true] %s429
      %432 = dma.vmem_to_hbm [thread:$0]  %s430, 128, %s7, [#allocation12]
    $region49: #{tpu_custom_call.1} parent=1 // pred_fallthru
      _
    // Predicated region
    $region50: #{tpu_custom_call.1} parent=1 // pred_check
      _
    $region51: #{tpu_custom_call.1} parent=1 // pred_check_branch
      %434 = sbr.rel (0) target = $region53
    $region52: #{tpu_custom_call.1} parent=1 // pred_region
      %435 = dma.done [#allocation4], 128
    $region53: #{tpu_custom_call.1} parent=1 // pred_fallthru
      _
    // Predicated region
    $region54: #{tpu_custom_call.1} parent=1 // pred_check
      _
    $region55: #{tpu_custom_call.1} parent=1 // pred_check_branch
      %437 = sbr.rel (0) target = $region57
    $region56: #{tpu_custom_call.1} parent=1 // pred_region
      %438 = dma.done [#allocation12], 128
    $region57: #{tpu_custom_call.1} parent=1 // pred_fallthru
      _
    %439 = vsyncpa [#allocation3], 1
    %440 = vsyncpa [#allocation6], 1
    %441 = vsyncpa [#allocation9], 1
    %442 = vsyncpa [#allocation4], 1
    %443 = vsyncpa [#allocation12], 1

</llo_original>
